<compile_context>
chip_gen: v5e
topology: v5e:2x2
jax: 0.10.0
libtpu: 0.0.40
codegen_flags: <defaults>
</compile_context>

<pallas_src>
import functools
import math

import jax
import jax.numpy as jnp
from jax.experimental import pallas as pl
from jax.experimental.pallas import tpu as pltpu

_SUBLANE = 8
_LANE = 128
_TINY = 1e-30                    # keeps rsqrt finite at z == 0 (output stays exactly 0)
_MIN_PALLAS_BYTES = 256 * 1024   # below this a single fused XLA elementwise op wins
_MIN_GRID_STEPS = 8              # keep both v7x TCs busy + overlap the DMA pipeline


def _round_up(x: int, m: int) -> int:
    return ((x + m - 1) // m) * m


def _default_block_rows() -> int:
    """Generation-aware block height for the (rows, 128) f32 stream."""
    try:
        kind = jax.devices()[0].device_kind.lower()
    except Exception:
        return 4096
    if "v7" in kind or "7x" in kind:
        return 8192   # 4 MiB/buffer -> 16 MiB double-buffered in+out (<= 32 MiB scoped)
    return 4096       # 2 MiB/buffer -> 8 MiB total (fits v5e's 16 MiB scoped VMEM)


def _cardioid_kernel(x_ref, o_ref):
    """x_ref: (rows, 128) float32 with lanes interleaved as [re, im, re, im, ...]."""
    x = x_ref[...]
    xs = x * x
    # Pair sum: np.roll convention => roll(xs, 127)[l] == xs[(l+1) % 128], so at
    # even lanes s == re^2 + im^2 of that complex element. Pairs never straddle a
    # 128-lane row (row width is even and pairs start at even offsets).
    s = xs + pltpu.roll(xs, shift=_LANE - 1, axis=1)
    # Cardioid scale, valid at even lanes (x == re there). rsqrt goes to the EUP.
    scale_e = 0.5 + 0.5 * x * jax.lax.rsqrt(s + _TINY)
    # Replicate each even-lane scale to its odd partner lane: one XLU roll + select.
    lane = jax.lax.broadcasted_iota(jnp.int32, x.shape, 1)
    is_even = (lane & 1) == 0
    scale = jnp.where(is_even, scale_e, pltpu.roll(scale_e, shift=1, axis=1))
    o_ref[...] = scale * x


def _to_interleaved_f32(z: jax.Array) -> jax.Array:
    """complex64[...] -> flat float32[2N] with re at even, im at odd indices."""
    try:
        x = jax.lax.bitcast_convert_type(z, jnp.float32)        # (*shape, 2), zero-copy
    except Exception:  # fallback if complex bitcast is unsupported (extra HBM passes)
        x = jnp.stack([jnp.real(z), jnp.imag(z)], axis=-1)
    return x.reshape(-1)


def _from_interleaved_f32(flat: jax.Array, shape) -> jax.Array:
    x = flat.reshape(*shape, 2)
    try:
        return jax.lax.bitcast_convert_type(x, jnp.complex64)   # zero-copy
    except Exception:
        return jax.lax.complex(x[..., 0], x[..., 1])


def _jnp_cardioid(z: jax.Array) -> jax.Array:
    """Fused-XLA fast path (small or non-lane-aligned inputs)."""
    re, im = jnp.real(z), jnp.imag(z)
    scale = 0.5 + 0.5 * re * jax.lax.rsqrt(re * re + im * im + _TINY)
    return (scale * z).astype(jnp.complex64)


def complex_cardioid(z: jax.Array, *, block_rows=None, use_pallas=None):
    """ComplexReLU(mode='cardioid'):  out = 0.5 * (1 + cos(angle(z))) * z."""
    if z.dtype != jnp.complex64:
        z = z.astype(jnp.complex64)
    shape = z.shape
    n = math.prod(shape)
    if n == 0:
        return z
    n_f = 2 * n
    if use_pallas is None:
        use_pallas = (8 * n) >= _MIN_PALLAS_BYTES
    lane_aligned = (n_f % _LANE == 0) and ((n_f // _LANE) >= _SUBLANE)
    if not (use_pallas and lane_aligned):
        # Small inputs (launch overhead dominates) and non-lane-aligned shapes
        # (padding would cost 2 extra HBM passes) use one fused elementwise op.
        return _jnp_cardioid(z)

    rows = n_f // _LANE
    x2d = _to_interleaved_f32(z).reshape(rows, _LANE)     # zero-copy lane-dense view

    if block_rows is None:
        block_rows = _default_block_rows()
    # Clamp so the grid has >= _MIN_GRID_STEPS steps; Pallas masks a ragged last block.
    br = min(_round_up(block_rows, _SUBLANE),
             _round_up(pl.cdiv(rows, _MIN_GRID_STEPS), _SUBLANE))
    br = max(br, _SUBLANE)
    grid = (pl.cdiv(rows, br),)

    spec = pl.BlockSpec((br, _LANE), lambda i: (i, 0))
    # 1 in + 1 out stream, double-buffered: <= 16 MiB VMEM even with the v7x tile,
    # inside default scoped-VMEM limits on v5e/v6e/v7x.
    out2d = pl.pallas_call(
        _cardioid_kernel,
        out_shape=jax.ShapeDtypeStruct((rows, _LANE), jnp.float32),
        grid=grid,
        in_specs=[spec],
        out_specs=spec,
        compiler_params=pltpu.CompilerParams(
            dimension_semantics=("parallel",),   # shards the loop across both TCs on v7x
        ),
        cost_estimate=pl.CostEstimate(
            flops=12 * n_f,            # ~11-12 VALU ops per f32 lane
            transcendentals=n_f,       # rsqrt on every lane
            bytes_accessed=8 * n_f,    # 4B in + 4B out per f32 lane
        ),
    )(x2d)

    return _from_interleaved_f32(out2d.reshape(-1), shape)


def _reference(z: jax.Array) -> jax.Array:
    ang = jnp.angle(z)
    return ((0.5 * (1.0 + jnp.cos(ang))) * z).astype(jnp.complex64)


# TODO(synk): only the 'cardioid' branch of ComplexReLU is implemented here; the
# 'cartesian'/'modulus'/'real' modes are simple elementwise variants not covered.

if __name__ == "__main__":
    key = jax.random.PRNGKey(0)
    k1, k2, k3, k4 = jax.random.split(key, 4)

    # Module-sized NCHW input [2, 4, 16, 16] complex64. Force the Pallas path
    # (the size heuristic would route something this small to the jnp fast path).
    shape = (2, 4, 16, 16)
    z = (jax.random.normal(k1, shape, dtype=jnp.float32)
         + 1j * jax.random.normal(k2, shape, dtype=jnp.float32)).astype(jnp.complex64)
    out = jax.block_until_ready(complex_cardioid(z, use_pallas=True))
    assert out.shape == shape and out.dtype == jnp.complex64
    assert jnp.allclose(out, _reference(z), atol=1e-5, rtol=1e-5)

    # A larger input that exercises a multi-step (grid ~= 8) pipeline.
    shape_b = (4, 8, 32, 32)       # 32768 complex64 elements = 256 KiB
    zb = (jax.random.normal(k3, shape_b, dtype=jnp.float32)
          + 1j * jax.random.normal(k4, shape_b, dtype=jnp.float32)).astype(jnp.complex64)
    outb = jax.block_until_ready(complex_cardioid(zb))
    assert jnp.allclose(outb, _reference(zb), atol=1e-5, rtol=1e-5)

    # Non-lane-aligned shape -> fused jnp fallback (no pad/unpad HBM passes).
    shape_c = (2, 3, 5, 7)
    zc = (jax.random.normal(k1, shape_c, dtype=jnp.float32)
          + 1j * jax.random.normal(k2, shape_c, dtype=jnp.float32)).astype(jnp.complex64)
    outc = jax.block_until_ready(complex_cardioid(zc))
    assert jnp.allclose(outc, _reference(zc), atol=1e-5, rtol=1e-5)

    print("KERNEL_OK")
</pallas_src>

<mosaic_0001>
module attributes {stable_mosaic.version = 11 : i64} {
  func.func @_cardioid_kernel(%arg0: i32, %arg1: memref<8x128xf32, #tpu.memory_space<vmem>>, %arg2: memref<8x128xf32, #tpu.memory_space<vmem>>) attributes {dimension_semantics = [#tpu.dimension_semantics<parallel>], iteration_bounds = array<i64: 4>, scalar_prefetch = 0 : i64, scratch_operands = 0 : i64, tpu.core_type = #tpu.core_type<tc>, window_params = [{transform_indices = @transform_0, window_bounds = array<i64: 8, 128>}, {transform_indices = @transform_1, window_bounds = array<i64: 8, 128>}]} {
    %c0 = arith.constant 0 : index
    %c0_0 = arith.constant 0 : index
    %0 = vector.load %arg1[%c0, %c0_0] : memref<8x128xf32, #tpu.memory_space<vmem>>, vector<8x128xf32>
    %1 = arith.mulf %0, %0 : vector<8x128xf32>
    %c127_i32 = arith.constant 127 : i32
    %2 = tpu.dynamic_rotate %1 by %c127_i32 dim 1 : vector<8x128xf32>, i32 -> vector<8x128xf32>
    %3 = arith.addf %1, %2 : vector<8x128xf32>
    %cst = arith.constant 5.000000e-01 : f32
    %4 = vector.broadcast %cst : f32 to vector<8x128xf32>
    %5 = arith.mulf %4, %0 : vector<8x128xf32>
    %cst_1 = arith.constant 1.000000e-30 : f32
    %6 = vector.broadcast %cst_1 : f32 to vector<8x128xf32>
    %7 = arith.addf %3, %6 : vector<8x128xf32>
    %8 = math.rsqrt %7 : vector<8x128xf32>
    %9 = arith.mulf %5, %8 : vector<8x128xf32>
    %cst_2 = arith.constant 5.000000e-01 : f32
    %10 = vector.broadcast %cst_2 : f32 to vector<8x128xf32>
    %11 = arith.addf %10, %9 : vector<8x128xf32>
    %12 = tpu.iota {dimensions = array<i32: 1>} : vector<8x128xi32>
    %c1_i32 = arith.constant 1 : i32
    %13 = vector.broadcast %c1_i32 : i32 to vector<8x128xi32>
    %14 = arith.andi %12, %13 : vector<8x128xi32>
    %c0_i32 = arith.constant 0 : i32
    %15 = vector.broadcast %c0_i32 : i32 to vector<8x128xi32>
    %16 = arith.cmpi eq, %14, %15 : vector<8x128xi32>
    %c1_i32_3 = arith.constant 1 : i32
    %17 = tpu.dynamic_rotate %11 by %c1_i32_3 dim 1 : vector<8x128xf32>, i32 -> vector<8x128xf32>
    %18 = arith.select %16, %11, %17 : vector<8x128xi1>, vector<8x128xf32>
    %19 = arith.mulf %18, %0 : vector<8x128xf32>
    %c0_4 = arith.constant 0 : index
    %c0_5 = arith.constant 0 : index
    %20 = vector.load %arg2[%c0_4, %c0_5] : memref<8x128xf32, #tpu.memory_space<vmem>>, vector<8x128xf32>
    tpu.vector_store %arg2[%c0_4, %c0_5], %19 {strides = array<i32>} : memref<8x128xf32, #tpu.memory_space<vmem>>, vector<8x128xf32>,
    return
  }
  func.func @transform_0(%arg0: i32) -> (i32, i32) {
    %c0_i32 = arith.constant 0 : i32
    %c0_i32_0 = arith.constant 0 : i32
    return %arg0, %c0_i32 : i32, i32
  }
  func.func @transform_1(%arg0: i32) -> (i32, i32) {
    %c0_i32 = arith.constant 0 : i32
    %c0_i32_0 = arith.constant 0 : i32
    return %arg0, %c0_i32 : i32, i32
  }
}

</mosaic_0001>

<llo_original>
// kernel: tpu_custom_call.1
$region0: #{tpu_custom_call.1}
  #allocation0 [shape = 'u32[]', space=smem, size = 0x4, offset = 0x4, fixed_abs, tag = 'smem constant byte address 0x4 - core index']
  #allocation1 [shape = 'u32[72,128]{1,0:T(1,128)}', space=vmem, size = 0x9000, scoped, tag = 'internal scratch']
  %s0 = inlined_call_operand.hbm [shape: f32[32,128], index: 0, kind: input, shape index: {}]
  %s1 = inlined_call_operand.hbm [shape: f32[32,128], index: 1, kind: output, shape index: {}]
  %s2 = sld [smem:[#allocation0]]
  $region41: #{tpu_custom_call.1} parent=0
    _
  %s4 = ssub.s32 1, %s2
  %s5 = scalar_select 0, %s4, %s2
  $region1: #{tpu_custom_call.1} parent=0
    #allocation2 [shape = 'u8[8192]{0}', space=vmem, size = 0x2000, scoped, tag = 'input window, operand 0']
    #allocation3 [shape = 's32[2]{0}', space=sflag, size = 0x8, scoped, tag = 'scoped memory for tpu_custom_call.1']
    #allocation4 [shape = 's32[2]{0}', space=sflag, size = 0x8, scoped, tag = 'scoped memory for tpu_custom_call.1']
    #allocation5 [shape = 'u8[8192]{0}', space=vmem, size = 0x2000, scoped, tag = 'output window, operand 0']
    %6 = vsyncpa [#allocation3], 0
    %s7 = scalar_lea.sflag [#allocation3], 1
    %8 = vsyncpa %s7, 0
    %9 = vsyncpa [#allocation4], 0
    %s10 = scalar_lea.sflag [#allocation4], 1
    %11 = vsyncpa %s10, 0
    loop: start=0, step=1, limit=6
    $region2: #{tpu_custom_call.1} parent=1 // loop_pre_header
      _
    $region3: #{tpu_custom_call.1} parent=1 // loop_header
      %s13 = sphi 0, %s17
      %p14 = scmp.ge.s32.totalorder %s13, 6
      %s23 = sphi 0, %s25
      %s26 = sphi 0, %s23
      %s27 = sphi 0, %s26
      %s43 = sphi 0, %s27
      %s49 = sphi 0, %s51
      %s52 = sphi 0, %s49
      %s53 = sphi 0, %s52
      %s69 = sphi 0, %s53
    $region4: #{tpu_custom_call.1} parent=1 // loop_header_branch
      %16 = sbr.rel (%p14) target = $region8
    $region5: #{tpu_custom_call.1} parent=1 // loop_body
      %s18 = ssub.s32 %s13, 1
      %s19 = ssub.s32 %s13, 2
      %s20 = sadd.s32 %s13, 1
      %s21 = ssub.s32 %s13, %s20
      %p22 = scmp.eq.s32.totalorder %s21, 0
      %s24 = sadd.s32 %s23, 1
      %s25 = scalar_select %p22, %s23, %s24
      %p28 = pneg %p22
      %p29 = scmp.eq.s32.totalorder %s13, 3
      %p30 = por %p28, %p29
      %p31 = scmp.ne.s32.totalorder %s23, %s26
      %p32 = scmp.eq.s32.totalorder %s13, 0
      %p33 = por %p31, %p32
      %p34 = scmp.ne.s32.totalorder %s23, %s26
      %p35 = scmp.eq.s32.totalorder %s18, 3
      %p36 = por %p34, %p35
      %p37 = scmp.ne.s32.totalorder %s26, %s27
      %p38 = scmp.eq.s32.totalorder %s18, 0
      %p39 = por %p37, %p38
      %p40 = scmp.ne.s32.totalorder %s26, %s27
      %p41 = scmp.eq.s32.totalorder %s19, 3
      %p42 = por %p40, %p41
      %p44 = scmp.ne.s32.totalorder %s27, %s43
      %p45 = scmp.eq.s32.totalorder %s19, 0
      %p46 = por %p44, %p45
      %s47 = ssub.s32 %s13, %s20
      %p48 = scmp.eq.s32.totalorder %s47, 0
      %s50 = sadd.s32 %s49, 1
      %s51 = scalar_select %p48, %s49, %s50
      %p54 = pneg %p48
      %p55 = scmp.eq.s32.totalorder %s13, 3
      %p56 = por %p54, %p55
      %p57 = scmp.ne.s32.totalorder %s49, %s52
      %p58 = scmp.eq.s32.totalorder %s13, 0
      %p59 = por %p57, %p58
      %p60 = scmp.ne.s32.totalorder %s49, %s52
      %p61 = scmp.eq.s32.totalorder %s18, 3
      %p62 = por %p60, %p61
      %p63 = scmp.ne.s32.totalorder %s52, %s53
      %p64 = scmp.eq.s32.totalorder %s18, 0
      %p65 = por %p63, %p64
      %p66 = scmp.ne.s32.totalorder %s52, %s53
      %p67 = scmp.eq.s32.totalorder %s19, 3
      %p68 = por %p66, %p67
      %p70 = scmp.ne.s32.totalorder %s53, %s69
      %p71 = scmp.eq.s32.totalorder %s19, 0
      %p72 = por %p70, %p71
      %p73 = scmp.le.s32.totalorder 1, %s13
      %p74 = scmp.lt.s32.totalorder %s13, 5
      %p75 = pnand %p73, %p74
      %p76 = pneg %p75
      // Predicated region
      $region9: #{tpu_custom_call.1} parent=5 // pred_check
        _
      $region10: #{tpu_custom_call.1} parent=5 // pred_check_branch
        %78 = sbr.rel (%p75) target = $region12
      $region11: #{tpu_custom_call.1} parent=5 // pred_region
        %s79 = ssub.s32 %s13, 1
      $region12: #{tpu_custom_call.1} parent=5 // pred_fallthru
        _
      %p80 = scmp.lt.s32.totalorder %s13, 4
      // Predicated region
      $region13: #{tpu_custom_call.1} parent=5 // pred_check
        %p81 = pneg %p80
      $region14: #{tpu_custom_call.1} parent=5 // pred_check_branch
        %83 = sbr.rel (%p81) target = $region16
      $region15: #{tpu_custom_call.1} parent=5 // pred_region
        // Predicated region
        $region17: #{tpu_custom_call.1} parent=15 // pred_check
          %p84 = pneg %p33
        $region18: #{tpu_custom_call.1} parent=15 // pred_check_branch
          %86 = sbr.rel (%p84) target = $region20
        $region19: #{tpu_custom_call.1} parent=15 // pred_region
          %s87 = sand.u32 %s23, 1
          %s88 = scalar_lea.sflag [#allocation3], %s87
          %s89 = sand.u32 %s23, 1
          %s90 = smul.addr %s89, 8
          %s91 = scalar_lea.vmem [#allocation2], %s90
          %93 = vsyncadd %s88, 0
          %s94 = smul.addr %s13, 8
          %s95 = scalar_lea.hbm %s0, %s94
          %s97 = sshll.u32 %s95, 4
          %s98 = int_to_ptr.hbm [resolvable:$true] %s97
          %s99 = sshll.u32 %s91, 4
          %s100 = int_to_ptr.vmem [resolvable:$true] %s99
          %102 = dma.hbm_to_vmem [thread:$0]  %s98, 128, %s100, %s88
        $region20: #{tpu_custom_call.1} parent=15 // pred_fallthru
          _
      $region16: #{tpu_custom_call.1} parent=5 // pred_fallthru
        _
      %p103 = scmp.le.s32.totalorder 1, %s13
      %p104 = scmp.lt.s32.totalorder %s13, 5
      %p105 = pnand %p103, %p104
      %p106 = pneg %p105
      // Predicated region
      $region21: #{tpu_custom_call.1} parent=5 // pred_check
        _
      $region22: #{tpu_custom_call.1} parent=5 // pred_check_branch
        %108 = sbr.rel (%p105) target = $region24
      $region23: #{tpu_custom_call.1} parent=5 // pred_region
        %s109 = ssub.s32 %s13, 1
        %s110 = sand.u32 %s26, 1
        %s111 = scalar_lea.sflag [#allocation3], %s110
        %s112 = sand.u32 %s26, 1
        %s113 = smul.addr %s112, 8
        %s114 = scalar_lea.vmem [#allocation2], %s113
        // Predicated region
        $region25: #{tpu_custom_call.1} parent=23 // pred_check
          %p115 = pneg %p39
        $region26: #{tpu_custom_call.1} parent=23 // pred_check_branch
          %117 = sbr.rel (%p115) target = $region28
        $region27: #{tpu_custom_call.1} parent=23 // pred_region
          %119 = dma.done %s111, 128
        $region28: #{tpu_custom_call.1} parent=23 // pred_fallthru
          _
        %s120 = sand.u32 %s26, 1
        %s121 = scalar_lea.sflag [#allocation3], %s120
        %s122 = sand.u32 %s26, 1
        %s123 = smul.addr %s122, 8
        %s124 = scalar_lea.vmem [#allocation2], %s123
        %p125 = pneg %p39
        %p126 = pneg %p36
        %p127 = pneg %p65
        %p128 = pneg %p62
        %s129 = sand.u32 %s52, 1
        %s130 = scalar_lea.sflag [#allocation4], %s129
        %s131 = sand.u32 %s52, 1
        %s132 = smul.addr %s131, 8
        %s133 = scalar_lea.vmem [#allocation5], %s132
        %v134 = vld [vmem:[%s114] sm:$0xff]
        %v135 = vmul.f32 %v134, %v134
        %136 = vrot.lane.b32.xlu0 %v135, 127
        %v137 = vpop.permute.xlu0 %136
        %v138 = vadd.f32 %v135, %v137
        %v139 = vmul.f32 %v134, 0.5
        %v140 = vadd.f32 %v138, 1e-30
        %v141 = vrsqrt.pop %v140
        %v142 = vmul.f32 %v141, %v140
        %v143 = vmul.f32 %v142, %v141
        %v144 = vmul.f32 0.5, %v143
        %v145 = vsub.f32 1.5, %v144
        %v146 = vmul.f32 %v141, %v145
        %vm147 = vweird.f32 %v140
        %vm148 = vweird.f32 %v141
        %vm149 = vmor %vm147, %vm148
        %v150 = vsel %vm149, %v141, %v146
        %v151 = vmul.f32 %v139, %v150
        %v152 = vadd.f32 %v151, 0.5
        %v153 = vlaneseq
        %v154 = vand.u32 %v153, 127
        %v155 = vand.u32 %v154, 1
        %vm156 = vcmp.eq.s32.totalorder %v155, 0
        %157 = vrot.lane.b32.xlu0 %v152, 1
        %v158 = vpop.permute.xlu0 %157
        %v159 = vsel %vm156, %v152, %v158
        %v160 = vmul.f32 %v159, %v134
        %161 = vst [vmem:[%s133] sm:$0xff] %v160
        %s162 = sand.u32 %s52, 1
        %s163 = scalar_lea.sflag [#allocation4], %s162
        %s164 = sand.u32 %s52, 1
        %s165 = smul.addr %s164, 8
        %s166 = scalar_lea.vmem [#allocation5], %s165
        // Predicated region
        $region29: #{tpu_custom_call.1} parent=23 // pred_check
          %p167 = pneg %p62
        $region30: #{tpu_custom_call.1} parent=23 // pred_check_branch
          %169 = sbr.rel (%p167) target = $region32
        $region31: #{tpu_custom_call.1} parent=23 // pred_region
          %171 = vsyncadd %s163, 0
          %s172 = smul.addr %s18, 8
          %s173 = scalar_lea.hbm %s1, %s172
          %s175 = sshll.u32 %s166, 4
          %s176 = int_to_ptr.vmem [resolvable:$true] %s175
          %s177 = sshll.u32 %s173, 4
          %s178 = int_to_ptr.hbm [resolvable:$true] %s177
          %180 = dma.vmem_to_hbm [thread:$0]  %s176, 128, %s178, %s163
        $region32: #{tpu_custom_call.1} parent=23 // pred_fallthru
          _
      $region24: #{tpu_custom_call.1} parent=5 // pred_fallthru
        _
      %p181 = scmp.le.s32.totalorder 2, %s13
      // Predicated region
      $region33: #{tpu_custom_call.1} parent=5 // pred_check
        %p182 = pneg %p181
      $region34: #{tpu_custom_call.1} parent=5 // pred_check_branch
        %184 = sbr.rel (%p182) target = $region36
      $region35: #{tpu_custom_call.1} parent=5 // pred_region
        %s185 = ssub.s32 %s13, 2
        // Predicated region
        $region37: #{tpu_custom_call.1} parent=35 // pred_check
          %p186 = pneg %p68
        $region38: #{tpu_custom_call.1} parent=35 // pred_check_branch
          %188 = sbr.rel (%p186) target = $region40
        $region39: #{tpu_custom_call.1} parent=35 // pred_region
          %s189 = sand.u32 %s53, 1
          %s190 = scalar_lea.sflag [#allocation4], %s189
          %s191 = sand.u32 %s53, 1
          %s192 = smul.addr %s191, 8
          %s193 = scalar_lea.vmem [#allocation5], %s192
          %195 = dma.done %s190, 128
        $region40: #{tpu_custom_call.1} parent=35 // pred_fallthru
          _
      $region36: #{tpu_custom_call.1} parent=5 // pred_fallthru
        _
    $region6: #{tpu_custom_call.1} parent=1 // loop_footer
      %s17 = sadd.s32 1, %s13
    $region7: #{tpu_custom_call.1} parent=1 // loop_footer_branch
      %12 = sbr.rel target = $region3
    $region8: #{tpu_custom_call.1} parent=1 // loop_exit
      _
    %196 = vsyncpa [#allocation3], 1
    %s197 = scalar_lea.sflag [#allocation3], 1
    %198 = vsyncpa %s197, 1
    %199 = vsyncpa [#allocation4], 1
    %s200 = scalar_lea.sflag [#allocation4], 1
    %201 = vsyncpa %s200, 1

</llo_original>
